<compile_context>
chip_gen: v7x
topology: tpu7x:2x2x1
jax: 0.10.0
libtpu: 0.0.40
codegen_flags: <defaults>
</compile_context>

<pallas_src>
import functools
import math

import jax
import jax.numpy as jnp
from jax.experimental import pallas as pl
from jax.experimental.pallas import tpu as pltpu

LEAKY_SLOPE = 0.01            # PyTorch F.leaky_relu default negative_slope
LANE = 128                    # vreg lane width
SUBLANE = 8                   # vreg sublane height (f32)
MAX_TILE_B = 512              # batch tile: fills MXU height, amortizes step cost
COMPUTE_DTYPE = jnp.bfloat16  # MXU operand dtype (accumulation stays f32)


def _round_up(v, m):
    return ((v + m - 1) // m) * m


def _mlp_kernel(*refs, num_layers):
    """refs = (x_ref, w0_ref, ..., w{L-1}_ref, o_ref).

    One batch tile per grid step; all layers fused, weights VMEM-resident.
    Matmuls run in the operand dtype (bf16) with f32 accumulation; leaky_relu
    is applied to the f32 accumulator, then re-cast for the next MXU pass.
    The final layer writes the f32 result lane-dense.
    """
    x_ref = refs[0]
    w_refs = refs[1:1 + num_layers]
    o_ref = refs[1 + num_layers]

    h = x_ref[...]
    for li in range(num_layers):
        acc = jnp.dot(h, w_refs[li][...], preferred_element_type=jnp.float32)
        if li < num_layers - 1:
            acc = jnp.where(acc > 0, acc, LEAKY_SLOPE * acc)   # f32 elementwise
            h = acc.astype(w_refs[li].dtype)                   # bf16 for next dot
        else:
            o_ref[...] = acc.astype(o_ref.dtype)


def mlp_forward(x, weights_t, *, compute_dtype=COMPUTE_DTYPE):
    """Run the fused, batch-tiled MLP Pallas kernel.

    Args:
      x: (batch, latent_dim) or (latent_dim,) float32.
      weights_t: list of (in_dim, out_dim) float32 weight matrices
                 (already transposed from PyTorch's (out, in) layout).
    Returns:
      (batch, output_dim) or (output_dim,) float32, matching PyTorch semantics.
    """
    is_batched = x.ndim > 1
    if not is_batched:
        x = x[None, :]
    x = x.astype(jnp.float32)

    batch, latent_dim = x.shape
    out_dim = weights_t[-1].shape[1]
    num_layers = len(weights_t)

    # ---- lane-pad every feature axis to a multiple of 128 (zero pad is exact)
    dims = [latent_dim] + [w.shape[1] for w in weights_t]
    pdims = [_round_up(d, LANE) for d in dims]

    padded_ws = []
    for li, w in enumerate(weights_t):
        wp = jnp.pad(
            w.astype(compute_dtype),
            ((0, pdims[li] - w.shape[0]), (0, pdims[li + 1] - w.shape[1])),
        )
        padded_ws.append(wp)

    # ---- batch tiling: big tiles for big batches, sublane-aligned otherwise
    tile_b = MAX_TILE_B if batch >= MAX_TILE_B else _round_up(batch, SUBLANE)
    num_tiles = pl.cdiv(batch, tile_b)
    b_pad = num_tiles * tile_b

    xp = jnp.pad(
        x.astype(compute_dtype),
        ((0, b_pad - batch), (0, pdims[0] - latent_dim)),
    )

    # x / out tiled on the batch grid axis; weights are a single full-array
    # block with a constant index_map -> fetched once, resident across tiles.
    in_specs = [pl.BlockSpec((tile_b, pdims[0]), lambda i: (i, 0))]
    in_specs += [pl.BlockSpec(w.shape, lambda i: (0, 0)) for w in padded_ws]
    out_specs = pl.BlockSpec((tile_b, pdims[-1]), lambda i: (i, 0))

    flops = 2 * b_pad * sum(pdims[i] * pdims[i + 1] for i in range(num_layers))
    bytes_accessed = (
        xp.size * xp.dtype.itemsize
        + sum(w.size * w.dtype.itemsize for w in padded_ws)
        + b_pad * pdims[-1] * 4
    )

    out_padded = pl.pallas_call(
        functools.partial(_mlp_kernel, num_layers=num_layers),
        out_shape=jax.ShapeDtypeStruct((b_pad, pdims[-1]), jnp.float32),
        grid=(num_tiles,),
        in_specs=in_specs,
        out_specs=out_specs,
        compiler_params=pltpu.CompilerParams(
            dimension_semantics=("parallel",)),
        cost_estimate=pl.CostEstimate(
            flops=flops, transcendentals=0, bytes_accessed=bytes_accessed),
    )(xp, *padded_ws)

    out = out_padded[:batch, :out_dim]
    if not is_batched:
        out = out[0]
    return out


def init_net_params(key, latent_dim, output_dim, hid_layers=2, hid_dim=64):
    """Deterministic parameter init mirroring the PyTorch module.

    Hidden layers: kaiming_normal_(nonlinearity='leaky_relu') on (out, in)
      weights -> std = sqrt(2 / (1 + 0.01**2)) / sqrt(fan_in).
    Last layer: normal(mean=0, std=0.01).
    Returns weights already transposed to (in, out).
    """
    dims = [latent_dim] + [hid_dim] * hid_layers + [output_dim]
    num_layers = len(dims) - 1
    keys = jax.random.split(key, num_layers)
    gain = math.sqrt(2.0 / (1.0 + LEAKY_SLOPE ** 2))

    weights_t = []
    for li in range(num_layers):
        fan_in, fan_out = dims[li], dims[li + 1]
        std = gain / math.sqrt(fan_in) if li < num_layers - 1 else 0.01
        # PyTorch weight is (out, in); sample there, then transpose to (in, out).
        w = std * jax.random.normal(keys[li], (fan_out, fan_in), dtype=jnp.float32)
        weights_t.append(w.T)
    return weights_t


def reference_forward(x, weights_t, *, compute_dtype=COMPUTE_DTYPE):
    """Pure-JAX reference with the same dtype discipline as the kernel
    (bf16 matmul operands, f32 accumulation + leaky_relu)."""
    is_batched = x.ndim > 1
    h = (x if is_batched else x[None, :]).astype(compute_dtype)
    for li, w in enumerate(weights_t):
        acc = jnp.dot(h, w.astype(compute_dtype),
                      preferred_element_type=jnp.float32)
        if li < len(weights_t) - 1:
            acc = jnp.where(acc > 0, acc, LEAKY_SLOPE * acc)
            h = acc.astype(compute_dtype)
        else:
            h = acc
    return h if is_batched else h[0]


if __name__ == "__main__":
    key = jax.random.PRNGKey(0)
    k_x, k_params = jax.random.split(key)

    # Small shapes consistent with the module signature.
    batch, latent_dim, hid_dim, output_dim, hid_layers = 8, 32, 64, 16, 2

    x = jax.random.normal(k_x, (batch, latent_dim), dtype=jnp.float32)
    weights_t = init_net_params(k_params, latent_dim, output_dim,
                                hid_layers=hid_layers, hid_dim=hid_dim)

    # Batched forward
    out = jax.block_until_ready(mlp_forward(x, weights_t))
    ref = reference_forward(x, weights_t)
    assert out.shape == (batch, output_dim)
    assert jnp.allclose(out, ref, atol=1e-4, rtol=1e-4), "batched mismatch vs reference"

    # Unbatched forward (PyTorch squeeze/unsqueeze semantics)
    out1 = jax.block_until_ready(mlp_forward(x[0], weights_t))
    ref1 = reference_forward(x[0], weights_t)
    assert out1.shape == (output_dim,)
    assert jnp.allclose(out1, ref1, atol=1e-4, rtol=1e-4), "unbatched mismatch vs reference"

    print("KERNEL_OK")
</pallas_src>

<mosaic_0001>
module attributes {stable_mosaic.version = 11 : i64} {
  func.func @_mlp_kernel(%arg0: i32, %arg1: memref<8x128xbf16, #tpu.memory_space<vmem>>, %arg2: memref<128x128xbf16, #tpu.memory_space<vmem>>, %arg3: memref<128x128xbf16, #tpu.memory_space<vmem>>, %arg4: memref<128x128xbf16, #tpu.memory_space<vmem>>, %arg5: memref<8x128xf32, #tpu.memory_space<vmem>>) attributes {dimension_semantics = [#tpu.dimension_semantics<parallel>], iteration_bounds = array<i64: 1>, scalar_prefetch = 0 : i64, scratch_operands = 0 : i64, tpu.core_type = #tpu.core_type<tc>, window_params = [{transform_indices = @transform_0, window_bounds = array<i64: 8, 128>}, {pipeline_mode = #tpu.pipeline_mode<synchronous>, transform_indices = @transform_1, window_bounds = array<i64: 128, 128>}, {pipeline_mode = #tpu.pipeline_mode<synchronous>, transform_indices = @transform_2, window_bounds = array<i64: 128, 128>}, {pipeline_mode = #tpu.pipeline_mode<synchronous>, transform_indices = @transform_3, window_bounds = array<i64: 128, 128>}, {transform_indices = @transform_4, window_bounds = array<i64: 8, 128>}]} {
    %c0 = arith.constant 0 : index
    %c0_0 = arith.constant 0 : index
    %0 = vector.load %arg1[%c0, %c0_0] : memref<8x128xbf16, #tpu.memory_space<vmem>>, vector<8x128xbf16>
    %c0_1 = arith.constant 0 : index
    %c0_2 = arith.constant 0 : index
    %1 = vector.load %arg2[%c0_1, %c0_2] : memref<128x128xbf16, #tpu.memory_space<vmem>>, vector<128x128xbf16>
    %cst = arith.constant dense<0.000000e+00> : vector<8x128xf32>
    %2 = tpu.matmul %0, %1, %cst {dimension_numbers = #tpu.dot_dimension_numbers<[1], [0], [0], [1], [0, 0, 1, 1], [], []>} : vector<8x128xbf16>, vector<128x128xbf16>, vector<8x128xf32> -> vector<8x128xf32>
    %cst_3 = arith.constant 0.000000e+00 : f32
    %3 = vector.broadcast %cst_3 : f32 to vector<8x128xf32>
    %4 = arith.cmpf ogt, %2, %3 : vector<8x128xf32>
    %cst_4 = arith.constant 0.00999999977 : f32
    %5 = vector.broadcast %cst_4 : f32 to vector<8x128xf32>
    %6 = arith.mulf %5, %2 : vector<8x128xf32>
    %7 = arith.select %4, %2, %6 : vector<8x128xi1>, vector<8x128xf32>
    %8 = arith.truncf %7 : vector<8x128xf32> to vector<8x128xbf16>
    %c0_5 = arith.constant 0 : index
    %c0_6 = arith.constant 0 : index
    %9 = vector.load %arg3[%c0_5, %c0_6] : memref<128x128xbf16, #tpu.memory_space<vmem>>, vector<128x128xbf16>
    %cst_7 = arith.constant dense<0.000000e+00> : vector<8x128xf32>
    %10 = tpu.matmul %8, %9, %cst_7 {dimension_numbers = #tpu.dot_dimension_numbers<[1], [0], [0], [1], [0, 0, 1, 1], [], []>} : vector<8x128xbf16>, vector<128x128xbf16>, vector<8x128xf32> -> vector<8x128xf32>
    %cst_8 = arith.constant 0.000000e+00 : f32
    %11 = vector.broadcast %cst_8 : f32 to vector<8x128xf32>
    %12 = arith.cmpf ogt, %10, %11 : vector<8x128xf32>
    %cst_9 = arith.constant 0.00999999977 : f32
    %13 = vector.broadcast %cst_9 : f32 to vector<8x128xf32>
    %14 = arith.mulf %13, %10 : vector<8x128xf32>
    %15 = arith.select %12, %10, %14 : vector<8x128xi1>, vector<8x128xf32>
    %16 = arith.truncf %15 : vector<8x128xf32> to vector<8x128xbf16>
    %c0_10 = arith.constant 0 : index
    %c0_11 = arith.constant 0 : index
    %17 = vector.load %arg4[%c0_10, %c0_11] : memref<128x128xbf16, #tpu.memory_space<vmem>>, vector<128x128xbf16>
    %cst_12 = arith.constant dense<0.000000e+00> : vector<8x128xf32>
    %18 = tpu.matmul %16, %17, %cst_12 {dimension_numbers = #tpu.dot_dimension_numbers<[1], [0], [0], [1], [0, 0, 1, 1], [], []>} : vector<8x128xbf16>, vector<128x128xbf16>, vector<8x128xf32> -> vector<8x128xf32>
    %c0_13 = arith.constant 0 : index
    %c0_14 = arith.constant 0 : index
    %19 = vector.load %arg5[%c0_13, %c0_14] : memref<8x128xf32, #tpu.memory_space<vmem>>, vector<8x128xf32>
    tpu.vector_store %arg5[%c0_13, %c0_14], %18 {strides = array<i32>} : memref<8x128xf32, #tpu.memory_space<vmem>>, vector<8x128xf32>,
    return
  }
  func.func @transform_0(%arg0: i32) -> (i32, i32) {
    %c0_i32 = arith.constant 0 : i32
    %c0_i32_0 = arith.constant 0 : i32
    return %arg0, %c0_i32 : i32, i32
  }
  func.func @transform_1(%arg0: i32) -> (i32, i32) {
    %c0_i32 = arith.constant 0 : i32
    %c0_i32_0 = arith.constant 0 : i32
    %c0_i32_1 = arith.constant 0 : i32
    return %c0_i32, %c0_i32_0 : i32, i32
  }
  func.func @transform_2(%arg0: i32) -> (i32, i32) {
    %c0_i32 = arith.constant 0 : i32
    %c0_i32_0 = arith.constant 0 : i32
    %c0_i32_1 = arith.constant 0 : i32
    return %c0_i32, %c0_i32_0 : i32, i32
  }
  func.func @transform_3(%arg0: i32) -> (i32, i32) {
    %c0_i32 = arith.constant 0 : i32
    %c0_i32_0 = arith.constant 0 : i32
    %c0_i32_1 = arith.constant 0 : i32
    return %c0_i32, %c0_i32_0 : i32, i32
  }
  func.func @transform_4(%arg0: i32) -> (i32, i32) {
    %c0_i32 = arith.constant 0 : i32
    %c0_i32_0 = arith.constant 0 : i32
    return %arg0, %c0_i32 : i32, i32
  }
}

</mosaic_0001>

<llo_original>
// kernel: tpu_custom_call.1
$region0: #{tpu_custom_call.1}
  #allocation0 [shape = 'u32[]', space=smem, size = 0x4, offset = 0x4, fixed_abs, tag = 'smem constant byte address 0x4 - core index']
  #allocation1 [shape = 'u32[144,128]{1,0:T(1,128)}', space=vmem, size = 0x12000, scoped, tag = 'internal scratch']
  %s0 = inlined_call_operand.hbm [shape: bf16[8,128], index: 0, kind: input, shape index: {}]
  %s1 = inlined_call_operand.hbm [shape: bf16[128,128], index: 1, kind: input, shape index: {}]
  %s2 = inlined_call_operand.hbm [shape: bf16[128,128], index: 2, kind: input, shape index: {}]
  %s3 = inlined_call_operand.hbm [shape: bf16[128,128], index: 3, kind: input, shape index: {}]
  %s4 = inlined_call_operand.hbm [shape: f32[8,128], index: 4, kind: output, shape index: {}]
  %s5 = sld [smem:[#allocation0]]
  $region42: #{tpu_custom_call.1} parent=0
    _
  %s7 = ssub.s32 1, %s5
  %s8 = scalar_select 0, %s7, %s5
  $region1: #{tpu_custom_call.1} parent=0
    #allocation2 [shape = 'u8[2048]{0}', space=vmem, size = 0x800, scoped, tag = 'input window, operand 0, single buffered']
    #allocation3 [shape = 's32[1]{0}', space=sflag, size = 0x4, scoped, tag = 'scoped memory for tpu_custom_call.1']
    #allocation4 [shape = 's32[1]{0}', space=sflag, size = 0x4, scoped, tag = 'scoped memory for tpu_custom_call.1']
    #allocation5 [shape = 'u8[32768]{0}', space=vmem, size = 0x8000, scoped, tag = 'input window, operand 1, single buffered']
    #allocation6 [shape = 's32[1]{0}', space=sflag, size = 0x4, scoped, tag = 'scoped memory for tpu_custom_call.1']
    #allocation7 [shape = 'u8[32768]{0}', space=vmem, size = 0x8000, scoped, tag = 'input window, operand 2, single buffered']
    #allocation8 [shape = 'u8[32768]{0}', space=vmem, size = 0x8000, scoped, tag = 'input window, operand 3, single buffered']
    #allocation9 [shape = 's32[1]{0}', space=sflag, size = 0x4, scoped, tag = 'scoped memory for tpu_custom_call.1']
    #allocation10 [shape = 'u8[4096]{0}', space=vmem, size = 0x1000, scoped, tag = 'output window, operand 0, single buffered']
    %9 = vsyncpa [#allocation3], 0
    %10 = vsyncpa [#allocation6], 0
    %11 = vsyncpa [#allocation9], 0
    %12 = vsyncpa [#allocation4], 0
    // Predicated region
    $region2: #{tpu_custom_call.1} parent=1 // pred_check
      _
    $region3: #{tpu_custom_call.1} parent=1 // pred_check_branch
      %14 = sbr.rel (0) target = $region5
    $region4: #{tpu_custom_call.1} parent=1 // pred_region
      %s16 = ssub.s32 64, 64
      %17 = vsyncadd [#allocation3], %s16
      %s19 = sshll.u32 [#allocation2], 4
      %s20 = int_to_ptr.vmem [resolvable:$true] %s19
      %22 = dma.hbm_to_vmem [thread:$0]  %s0, 64, %s20, [#allocation3]
    $region5: #{tpu_custom_call.1} parent=1 // pred_fallthru
      _
    // Predicated region
    $region6: #{tpu_custom_call.1} parent=1 // pred_check
      _
    $region7: #{tpu_custom_call.1} parent=1 // pred_check_branch
      %24 = sbr.rel (0) target = $region9
    $region8: #{tpu_custom_call.1} parent=1 // pred_region
      %s26 = ssub.s32 1024, 1024
      %27 = vsyncadd [#allocation6], %s26
      %s28 = sshll.u32 [#allocation5], 4
      %s29 = int_to_ptr.vmem [resolvable:$true] %s28
      %34 = dma.hbm_to_vmem [thread:$0]  %s1, 1024, %s29, [#allocation6], 64, 64, 4
    $region9: #{tpu_custom_call.1} parent=1 // pred_fallthru
      _
    // Predicated region
    $region10: #{tpu_custom_call.1} parent=1 // pred_check
      _
    $region11: #{tpu_custom_call.1} parent=1 // pred_check_branch
      %36 = sbr.rel (0) target = $region13
    $region12: #{tpu_custom_call.1} parent=1 // pred_region
      %s38 = ssub.s32 1024, 1024
      %39 = vsyncadd [#allocation6], %s38
      %s40 = sshll.u32 [#allocation7], 4
      %s41 = int_to_ptr.vmem [resolvable:$true] %s40
      %46 = dma.hbm_to_vmem [thread:$0]  %s2, 1024, %s41, [#allocation6], 64, 64, 4
    $region13: #{tpu_custom_call.1} parent=1 // pred_fallthru
      _
    // Predicated region
    $region14: #{tpu_custom_call.1} parent=1 // pred_check
      _
    $region15: #{tpu_custom_call.1} parent=1 // pred_check_branch
      %48 = sbr.rel (0) target = $region17
    $region16: #{tpu_custom_call.1} parent=1 // pred_region
      %s50 = ssub.s32 1024, 1024
      %51 = vsyncadd [#allocation9], %s50
      %s52 = sshll.u32 [#allocation8], 4
      %s53 = int_to_ptr.vmem [resolvable:$true] %s52
      %58 = dma.hbm_to_vmem [thread:$0]  %s3, 1024, %s53, [#allocation9], 64, 64, 4
    $region17: #{tpu_custom_call.1} parent=1 // pred_fallthru
      _
    // Predicated region
    $region18: #{tpu_custom_call.1} parent=1 // pred_check
      _
    $region19: #{tpu_custom_call.1} parent=1 // pred_check_branch
      %60 = sbr.rel (0) target = $region21
    $region20: #{tpu_custom_call.1} parent=1 // pred_region
      %61 = dma.done [#allocation3], 64
    $region21: #{tpu_custom_call.1} parent=1 // pred_fallthru
      _
    // Predicated region
    $region22: #{tpu_custom_call.1} parent=1 // pred_check
      _
    $region23: #{tpu_custom_call.1} parent=1 // pred_check_branch
      %63 = sbr.rel (0) target = $region25
    $region24: #{tpu_custom_call.1} parent=1 // pred_region
      %64 = dma.done [#allocation6], 1024
    $region25: #{tpu_custom_call.1} parent=1 // pred_fallthru
      _
    // Predicated region
    $region26: #{tpu_custom_call.1} parent=1 // pred_check
      _
    $region27: #{tpu_custom_call.1} parent=1 // pred_check_branch
      %66 = sbr.rel (0) target = $region29
    $region28: #{tpu_custom_call.1} parent=1 // pred_region
      %67 = dma.done [#allocation6], 1024
    $region29: #{tpu_custom_call.1} parent=1 // pred_fallthru
      _
    // Predicated region
    $region30: #{tpu_custom_call.1} parent=1 // pred_check
      _
    $region31: #{tpu_custom_call.1} parent=1 // pred_check_branch
      %69 = sbr.rel (0) target = $region33
    $region32: #{tpu_custom_call.1} parent=1 // pred_region
      %70 = dma.done [#allocation9], 1024
    $region33: #{tpu_custom_call.1} parent=1 // pred_fallthru
      _
    %v72 = vld [vmem:[#allocation2] sm:$0xf]
    %v73 = vld [vmem:[#allocation5] sm:$0xf]
    %v74 = vld [vmem:[#allocation5 + $0x4] sm:$0xf]
    %v75 = vld [vmem:[#allocation5 + $0x8] sm:$0xf]
    %v76 = vld [vmem:[#allocation5 + $0xc] sm:$0xf]
    %v77 = vld [vmem:[#allocation5 + $0x10] sm:$0xf]
    %v78 = vld [vmem:[#allocation5 + $0x14] sm:$0xf]
    %v79 = vld [vmem:[#allocation5 + $0x18] sm:$0xf]
    %v80 = vld [vmem:[#allocation5 + $0x1c] sm:$0xf]
    %v81 = vld [vmem:[#allocation5 + $0x20] sm:$0xf]
    %v82 = vld [vmem:[#allocation5 + $0x24] sm:$0xf]
    %v83 = vld [vmem:[#allocation5 + $0x28] sm:$0xf]
    %v84 = vld [vmem:[#allocation5 + $0x2c] sm:$0xf]
    %v85 = vld [vmem:[#allocation5 + $0x30] sm:$0xf]
    %v86 = vld [vmem:[#allocation5 + $0x34] sm:$0xf]
    %v87 = vld [vmem:[#allocation5 + $0x38] sm:$0xf]
    %v88 = vld [vmem:[#allocation5 + $0x3c] sm:$0xf]
    %v105 = vunpack.c.l.b16 %v73
    %v106 = vunpack.c.l.b16 %v74
    %v107 = vunpack.c.l.b16 %v75
    %v108 = vunpack.c.l.b16 %v76
    %v109 = vunpack.c.l.b16 %v77
    %v110 = vunpack.c.l.b16 %v78
    %v111 = vunpack.c.l.b16 %v79
    %v112 = vunpack.c.l.b16 %v80
    %v113 = vunpack.c.l.b16 %v81
    %v114 = vunpack.c.l.b16 %v82
    %v115 = vunpack.c.l.b16 %v83
    %v116 = vunpack.c.l.b16 %v84
    %v117 = vunpack.c.l.b16 %v85
    %v118 = vunpack.c.l.b16 %v86
    %v119 = vunpack.c.l.b16 %v87
    %v120 = vunpack.c.l.b16 %v88
    %v121 = vpack.c.b16 %v106, %v105
    %v122 = vpack.c.b16 %v108, %v107
    %v123 = vpack.c.b16 %v110, %v109
    %v124 = vpack.c.b16 %v112, %v111
    %v125 = vpack.c.b16 %v114, %v113
    %v126 = vpack.c.b16 %v116, %v115
    %v127 = vpack.c.b16 %v118, %v117
    %v128 = vpack.c.b16 %v120, %v119
    %137 = vmatprep.subr.bf16.mxu0 0
    %138 = vmatpush1.bf16.msra.mxu0 %v121
    %139 = vmatprep.subr.bf16.mxu0 0
    %140 = vmatpush1.bf16.msra.mxu0 %v122
    %141 = vmatprep.subr.bf16.mxu0 0
    %142 = vmatpush1.bf16.msra.mxu0 %v123
    %143 = vmatprep.subr.bf16.mxu0 0
    %144 = vmatpush1.bf16.msra.mxu0 %v124
    %145 = vmatprep.subr.bf16.mxu0 0
    %146 = vmatpush1.bf16.msra.mxu0 %v125
    %147 = vmatprep.subr.bf16.mxu0 0
    %148 = vmatpush1.bf16.msra.mxu0 %v126
    %149 = vmatprep.subr.bf16.mxu0 0
    %150 = vmatpush1.bf16.msra.mxu0 %v127
    %151 = vmatprep.subr.bf16.mxu0 0
    %152 = vmatpush1.bf16.msra.mxu0 %v128
    %153 = vmatprep.subr.bf16.mxu0 0
    %154 = vmatpush1.bf16.msra.mxu0 0
    %155 = vmatprep.subr.bf16.mxu0 0
    %156 = vmatpush1.bf16.msra.mxu0 0
    %157 = vmatprep.subr.bf16.mxu0 0
    %158 = vmatpush1.bf16.msra.mxu0 0
    %159 = vmatprep.subr.bf16.mxu0 0
    %160 = vmatpush1.bf16.msra.mxu0 0
    %161 = vmatprep.subr.bf16.mxu0 0
    %162 = vmatpush1.bf16.msra.mxu0 0
    %163 = vmatprep.subr.bf16.mxu0 0
    %164 = vmatpush1.bf16.msra.mxu0 0
    %165 = vmatprep.subr.bf16.mxu0 0
    %166 = vmatpush1.bf16.msra.mxu0 0
    %167 = vmatprep.subr.bf16.mxu0 0
    %168 = vmatpush1.bf16.msra.mxu0 0
    %169 = vmatprep.mubr.bf16.mxu0 0
    %170 = vmatmul.mubr.bf16.gmra.mrb[0].mxu0 %v72
    %v171 = vpop.f32.mrb[0].mxu0
    %v172 = vadd.f32 0.0, %v171
    %v173 = vpop.f32.mrb[0].mxu0
    %v174 = vpop.f32.mrb[0].mxu0
    %v175 = vpop.f32.mrb[0].mxu0
    %176 = vdwg.mxu0
    %vm177 = vcmp.gt.f32.partialorder %v172, 0.0
    %v178 = vmul.f32 %v172, 0.01
    %v179 = vsel %vm177, %v172, %v178
    %v180 = vpack.c.bf16 %v179, %v179
    %v181 = vld [vmem:[#allocation7] sm:$0xf]
    %v182 = vld [vmem:[#allocation7 + $0x4] sm:$0xf]
    %v183 = vld [vmem:[#allocation7 + $0x8] sm:$0xf]
    %v184 = vld [vmem:[#allocation7 + $0xc] sm:$0xf]
    %v185 = vld [vmem:[#allocation7 + $0x10] sm:$0xf]
    %v186 = vld [vmem:[#allocation7 + $0x14] sm:$0xf]
    %v187 = vld [vmem:[#allocation7 + $0x18] sm:$0xf]
    %v188 = vld [vmem:[#allocation7 + $0x1c] sm:$0xf]
    %v189 = vld [vmem:[#allocation7 + $0x20] sm:$0xf]
    %v190 = vld [vmem:[#allocation7 + $0x24] sm:$0xf]
    %v191 = vld [vmem:[#allocation7 + $0x28] sm:$0xf]
    %v192 = vld [vmem:[#allocation7 + $0x2c] sm:$0xf]
    %v193 = vld [vmem:[#allocation7 + $0x30] sm:$0xf]
    %v194 = vld [vmem:[#allocation7 + $0x34] sm:$0xf]
    %v195 = vld [vmem:[#allocation7 + $0x38] sm:$0xf]
    %v196 = vld [vmem:[#allocation7 + $0x3c] sm:$0xf]
    %v213 = vunpack.c.l.b16 %v181
    %v214 = vunpack.c.l.b16 %v182
    %v215 = vunpack.c.l.b16 %v183
    %v216 = vunpack.c.l.b16 %v184
    %v217 = vunpack.c.l.b16 %v185
    %v218 = vunpack.c.l.b16 %v186
    %v219 = vunpack.c.l.b16 %v187
    %v220 = vunpack.c.l.b16 %v188
    %v221 = vunpack.c.l.b16 %v189
    %v222 = vunpack.c.l.b16 %v190
    %v223 = vunpack.c.l.b16 %v191
    %v224 = vunpack.c.l.b16 %v192
    %v225 = vunpack.c.l.b16 %v193
    %v226 = vunpack.c.l.b16 %v194
    %v227 = vunpack.c.l.b16 %v195
    %v228 = vunpack.c.l.b16 %v196
    %v229 = vpack.c.b16 %v214, %v213
    %v230 = vpack.c.b16 %v216, %v215
    %v231 = vpack.c.b16 %v218, %v217
    %v232 = vpack.c.b16 %v220, %v219
    %v233 = vpack.c.b16 %v222, %v221
    %v234 = vpack.c.b16 %v224, %v223
    %v235 = vpack.c.b16 %v226, %v225
    %v236 = vpack.c.b16 %v228, %v227
    %245 = vmatprep.subr.bf16.mxu0 0
    %246 = vmatpush1.bf16.msra.mxu0 %v229
    %247 = vmatprep.subr.bf16.mxu0 0
    %248 = vmatpush1.bf16.msra.mxu0 %v230
    %249 = vmatprep.subr.bf16.mxu0 0
    %250 = vmatpush1.bf16.msra.mxu0 %v231
    %251 = vmatprep.subr.bf16.mxu0 0
    %252 = vmatpush1.bf16.msra.mxu0 %v232
    %253 = vmatprep.subr.bf16.mxu0 0
    %254 = vmatpush1.bf16.msra.mxu0 %v233
    %255 = vmatprep.subr.bf16.mxu0 0
    %256 = vmatpush1.bf16.msra.mxu0 %v234
    %257 = vmatprep.subr.bf16.mxu0 0
    %258 = vmatpush1.bf16.msra.mxu0 %v235
    %259 = vmatprep.subr.bf16.mxu0 0
    %260 = vmatpush1.bf16.msra.mxu0 %v236
    %261 = vmatprep.subr.bf16.mxu0 0
    %262 = vmatpush1.bf16.msra.mxu0 0
    %263 = vmatprep.subr.bf16.mxu0 0
    %264 = vmatpush1.bf16.msra.mxu0 0
    %265 = vmatprep.subr.bf16.mxu0 0
    %266 = vmatpush1.bf16.msra.mxu0 0
    %267 = vmatprep.subr.bf16.mxu0 0
    %268 = vmatpush1.bf16.msra.mxu0 0
    %269 = vmatprep.subr.bf16.mxu0 0
    %270 = vmatpush1.bf16.msra.mxu0 0
    %271 = vmatprep.subr.bf16.mxu0 0
    %272 = vmatpush1.bf16.msra.mxu0 0
    %273 = vmatprep.subr.bf16.mxu0 0
    %274 = vmatpush1.bf16.msra.mxu0 0
    %275 = vmatprep.subr.bf16.mxu0 0
    %276 = vmatpush1.bf16.msra.mxu0 0
    %277 = vmatprep.mubr.bf16.mxu0 0
    %278 = vmatmul.mubr.bf16.gmra.mrb[0].mxu0 %v180
    %v279 = vpop.f32.mrb[0].mxu0
    %v280 = vadd.f32 0.0, %v279
    %v281 = vpop.f32.mrb[0].mxu0
    %v282 = vpop.f32.mrb[0].mxu0
    %v283 = vpop.f32.mrb[0].mxu0
    %284 = vdwg.mxu0
    %vm285 = vcmp.gt.f32.partialorder %v280, 0.0
    %v286 = vmul.f32 %v280, 0.01
    %v287 = vsel %vm285, %v280, %v286
    %v288 = vpack.c.bf16 %v287, %v287
    %v289 = vld [vmem:[#allocation8] sm:$0xf]
    %v290 = vld [vmem:[#allocation8 + $0x4] sm:$0xf]
    %v291 = vld [vmem:[#allocation8 + $0x8] sm:$0xf]
    %v292 = vld [vmem:[#allocation8 + $0xc] sm:$0xf]
    %v293 = vld [vmem:[#allocation8 + $0x10] sm:$0xf]
    %v294 = vld [vmem:[#allocation8 + $0x14] sm:$0xf]
    %v295 = vld [vmem:[#allocation8 + $0x18] sm:$0xf]
    %v296 = vld [vmem:[#allocation8 + $0x1c] sm:$0xf]
    %v297 = vld [vmem:[#allocation8 + $0x20] sm:$0xf]
    %v298 = vld [vmem:[#allocation8 + $0x24] sm:$0xf]
    %v299 = vld [vmem:[#allocation8 + $0x28] sm:$0xf]
    %v300 = vld [vmem:[#allocation8 + $0x2c] sm:$0xf]
    %v301 = vld [vmem:[#allocation8 + $0x30] sm:$0xf]
    %v302 = vld [vmem:[#allocation8 + $0x34] sm:$0xf]
    %v303 = vld [vmem:[#allocation8 + $0x38] sm:$0xf]
    %v304 = vld [vmem:[#allocation8 + $0x3c] sm:$0xf]
    %v321 = vunpack.c.l.b16 %v289
    %v322 = vunpack.c.l.b16 %v290
    %v323 = vunpack.c.l.b16 %v291
    %v324 = vunpack.c.l.b16 %v292
    %v325 = vunpack.c.l.b16 %v293
    %v326 = vunpack.c.l.b16 %v294
    %v327 = vunpack.c.l.b16 %v295
    %v328 = vunpack.c.l.b16 %v296
    %v329 = vunpack.c.l.b16 %v297
    %v330 = vunpack.c.l.b16 %v298
    %v331 = vunpack.c.l.b16 %v299
    %v332 = vunpack.c.l.b16 %v300
    %v333 = vunpack.c.l.b16 %v301
    %v334 = vunpack.c.l.b16 %v302
    %v335 = vunpack.c.l.b16 %v303
    %v336 = vunpack.c.l.b16 %v304
    %v337 = vpack.c.b16 %v322, %v321
    %v338 = vpack.c.b16 %v324, %v323
    %v339 = vpack.c.b16 %v326, %v325
    %v340 = vpack.c.b16 %v328, %v327
    %v341 = vpack.c.b16 %v330, %v329
    %v342 = vpack.c.b16 %v332, %v331
    %v343 = vpack.c.b16 %v334, %v333
    %v344 = vpack.c.b16 %v336, %v335
    %353 = vmatprep.subr.bf16.mxu0 0
    %354 = vmatpush1.bf16.msra.mxu0 %v337
    %355 = vmatprep.subr.bf16.mxu0 0
    %356 = vmatpush1.bf16.msra.mxu0 %v338
    %357 = vmatprep.subr.bf16.mxu0 0
    %358 = vmatpush1.bf16.msra.mxu0 %v339
    %359 = vmatprep.subr.bf16.mxu0 0
    %360 = vmatpush1.bf16.msra.mxu0 %v340
    %361 = vmatprep.subr.bf16.mxu0 0
    %362 = vmatpush1.bf16.msra.mxu0 %v341
    %363 = vmatprep.subr.bf16.mxu0 0
    %364 = vmatpush1.bf16.msra.mxu0 %v342
    %365 = vmatprep.subr.bf16.mxu0 0
    %366 = vmatpush1.bf16.msra.mxu0 %v343
    %367 = vmatprep.subr.bf16.mxu0 0
    %368 = vmatpush1.bf16.msra.mxu0 %v344
    %369 = vmatprep.subr.bf16.mxu0 0
    %370 = vmatpush1.bf16.msra.mxu0 0
    %371 = vmatprep.subr.bf16.mxu0 0
    %372 = vmatpush1.bf16.msra.mxu0 0
    %373 = vmatprep.subr.bf16.mxu0 0
    %374 = vmatpush1.bf16.msra.mxu0 0
    %375 = vmatprep.subr.bf16.mxu0 0
    %376 = vmatpush1.bf16.msra.mxu0 0
    %377 = vmatprep.subr.bf16.mxu0 0
    %378 = vmatpush1.bf16.msra.mxu0 0
    %379 = vmatprep.subr.bf16.mxu0 0
    %380 = vmatpush1.bf16.msra.mxu0 0
    %381 = vmatprep.subr.bf16.mxu0 0
    %382 = vmatpush1.bf16.msra.mxu0 0
    %383 = vmatprep.subr.bf16.mxu0 0
    %384 = vmatpush1.bf16.msra.mxu0 0
    %385 = vmatprep.mubr.bf16.mxu0 0
    %386 = vmatmul.mubr.bf16.gmra.mrb[0].mxu0 %v288
    %v387 = vpop.f32.mrb[0].mxu0
    %v388 = vadd.f32 0.0, %v387
    %v389 = vpop.f32.mrb[0].mxu0
    %v390 = vpop.f32.mrb[0].mxu0
    %v391 = vpop.f32.mrb[0].mxu0
    %392 = vdwg.mxu0
    %393 = vst [vmem:[#allocation10] sm:$0xff] %v388
    // Predicated region
    $region34: #{tpu_custom_call.1} parent=1 // pred_check
      _
    $region35: #{tpu_custom_call.1} parent=1 // pred_check_branch
      %395 = sbr.rel (0) target = $region37
    $region36: #{tpu_custom_call.1} parent=1 // pred_region
      %s397 = ssub.s32 128, 128
      %398 = vsyncadd [#allocation4], %s397
      %s400 = sshll.u32 [#allocation10], 4
      %s401 = int_to_ptr.vmem [resolvable:$true] %s400
      %403 = dma.vmem_to_hbm [thread:$0]  %s401, 128, %s4, [#allocation4]
    $region37: #{tpu_custom_call.1} parent=1 // pred_fallthru
      _
    // Predicated region
    $region38: #{tpu_custom_call.1} parent=1 // pred_check
      _
    $region39: #{tpu_custom_call.1} parent=1 // pred_check_branch
      %405 = sbr.rel (0) target = $region41
    $region40: #{tpu_custom_call.1} parent=1 // pred_region
      %406 = dma.done [#allocation4], 128
    $region41: #{tpu_custom_call.1} parent=1 // pred_fallthru
      _
    %407 = vsyncpa [#allocation3], 1
    %408 = vsyncpa [#allocation6], 1
    %409 = vsyncpa [#allocation9], 1
    %410 = vsyncpa [#allocation4], 1

</llo_original>
